<compile_context>
chip_gen: v7x
topology: tpu7x:2x2x1
jax: 0.10.0
libtpu: 0.0.40
codegen_flags: <defaults>
</compile_context>

<pallas_src>
import jax
import jax.numpy as jnp
from jax.experimental import pallas as pl
from jax.experimental.pallas import tpu as pltpu


def _channel_attn_kernel(x_ref, w1t_ref, w2t_ref, o_ref):
    # x_ref / o_ref: (Nb, C, HW)   w1t_ref: (C, Cr)   w2t_ref: (Cr, C)
    nb, _, hw = x_ref.shape
    inv_hw = jnp.float32(1.0 / hw)

    # Global pools over the pixel (lane) axis.  Per-use reads of the VMEM-
    # resident block: no extra HBM traffic, no big live value to spill.
    # Accumulate the avg pool in f32 (matches fp32 pooling even for bf16 x).
    avg = jnp.sum(x_ref[...].astype(jnp.float32), axis=-1) * inv_hw   # (Nb, C)
    mx = jnp.max(x_ref[...], axis=-1).astype(jnp.float32)             # (Nb, C)

    # Both excite branches (and all Nb images) fused into one fc1/fc2 pass:
    #   p: (2*Nb, C) -> relu(p @ fc1.T): (2*Nb, Cr) -> @ fc2.T: (2*Nb, C)
    p = jnp.concatenate([avg, mx], axis=0)
    h = jnp.maximum(
        jnp.dot(p, w1t_ref[...], preferred_element_type=jnp.float32), 0.0)
    g = jnp.dot(h, w2t_ref[...], preferred_element_type=jnp.float32)  # (2*Nb, C)
    scale = jax.nn.sigmoid(g[:nb] + g[nb:])                           # (Nb, C)

    # Per-channel gate broadcast over all pixels; x re-read from VMEM,
    # lane-dense store.
    o_ref[...] = (x_ref[...].astype(jnp.float32) * scale[:, :, None]).astype(
        o_ref.dtype)


def _pick_nb(n, per_image_bytes, target_block_bytes=2 << 20):
    """Images per grid step: ~target_block_bytes per block, >=2 grid steps."""
    nb = max(1, int(target_block_bytes // max(per_image_bytes, 1)))
    if n >= 2:
        nb = min(nb, n // 2)          # keep >= 2 grid steps for megacore
    nb = max(1, min(nb, n))
    while n % nb:                     # Nb must divide N (no ragged last block)
        nb -= 1
    return nb


@jax.jit
def channel_attention_forward(x_nchw, w_fc1, w_fc2):
    """x_nchw: (N, C, H, W).  w_fc1: (C//16, C).  w_fc2: (C, C//16).

    Weights are the PyTorch 1x1-conv weights with the trailing (1, 1) squeezed.
    """
    N, C, H, W = x_nchw.shape
    Cr = w_fc1.shape[0]
    HW = H * W
    itemsize = x_nchw.dtype.itemsize

    nb = _pick_nb(N, C * HW * itemsize)
    grid = (N // nb,)

    # Explicit VMEM budget: in + out blocks (double-buffered) + resident
    # weights + headroom.  Cap at ~48 MiB so the request also fits v7x (64 MiB).
    # TODO(synk): for very large C*HW (single-image block >> 10 MiB) switch to
    # an HW-tiled two-pass pool/scale design instead of one resident image.
    block_bytes = nb * C * HW * itemsize
    vmem_needed = 4 * block_bytes + 8 * Cr * C * 4 + (2 << 20)
    vmem_limit = int(min(max(vmem_needed, 32 << 20), 48 << 20))

    # NCHW -> (N, C, H*W): pure reshape (no HBM relayout); channels on
    # sublanes, pixels on lanes.
    x3 = x_nchw.reshape(N, C, HW)
    # Pre-transpose the tiny weights so the in-kernel dots need no transposes.
    w1t = w_fc1.T    # (C, Cr)
    w2t = w_fc2.T    # (Cr, C)

    out = pl.pallas_call(
        _channel_attn_kernel,
        out_shape=jax.ShapeDtypeStruct((N, C, HW), x_nchw.dtype),
        grid_spec=pltpu.PrefetchScalarGridSpec(
            num_scalar_prefetch=0,
            grid=grid,
            in_specs=[
                pl.BlockSpec((nb, C, HW), lambda n: (n, 0, 0)),  # Nb images/step
                pl.BlockSpec((C, Cr), lambda n: (0, 0)),         # grid-invariant
                pl.BlockSpec((Cr, C), lambda n: (0, 0)),         # grid-invariant
            ],
            out_specs=pl.BlockSpec((nb, C, HW), lambda n: (n, 0, 0)),
        ),
        compiler_params=pltpu.CompilerParams(
            dimension_semantics=("parallel",),
            vmem_limit_bytes=vmem_limit,
        ),
    )(x3, w1t, w2t)

    return out.reshape(N, C, H, W)


def _reference(x_nchw, w_fc1, w_fc2):
    avg = jnp.mean(x_nchw, axis=(2, 3))  # (N, C)
    mx = jnp.max(x_nchw, axis=(2, 3))    # (N, C)

    def mlp(v):  # (N, C) -> (N, C)
        return jnp.maximum(v @ w_fc1.T, 0.0) @ w_fc2.T

    scale = jax.nn.sigmoid(mlp(avg) + mlp(mx))[:, :, None, None]
    return scale * x_nchw


if __name__ == "__main__":
    # Small but valid shapes: channels must be >= 16 (fc1 is C -> C // 16).
    N, C, H, W = 2, 64, 16, 16
    Cr = C // 16  # 4

    key = jax.random.PRNGKey(0)
    k_x, k_w1, k_w2 = jax.random.split(key, 3)

    x = jax.random.normal(k_x, (N, C, H, W), jnp.float32)
    # Conv2d 1x1 weights with trailing (1, 1) squeezed: fc1 (Cr, C), fc2 (C, Cr).
    w_fc1 = jax.random.normal(k_w1, (Cr, C), jnp.float32) * 0.1
    w_fc2 = jax.random.normal(k_w2, (C, Cr), jnp.float32) * 0.1

    out = channel_attention_forward(x, w_fc1, w_fc2)
    out = jax.block_until_ready(out)

    ref = _reference(x, w_fc1, w_fc2)
    assert out.shape == (N, C, H, W)
    assert jnp.allclose(out, ref, atol=1e-5, rtol=1e-5), (
        float(jnp.max(jnp.abs(out - ref))))

    print("KERNEL_OK")
</pallas_src>

<mosaic_0001>
module attributes {stable_mosaic.version = 11 : i64} {
  func.func @_channel_attn_kernel(%arg0: i32, %arg1: memref<1x64x256xf32, #tpu.memory_space<vmem>>, %arg2: memref<64x4xf32, #tpu.memory_space<vmem>>, %arg3: memref<4x64xf32, #tpu.memory_space<vmem>>, %arg4: memref<1x64x256xf32, #tpu.memory_space<vmem>>) attributes {dimension_semantics = [#tpu.dimension_semantics<parallel>], iteration_bounds = array<i64: 2>, scalar_prefetch = 0 : i64, scratch_operands = 0 : i64, tpu.core_type = #tpu.core_type<tc>, window_params = [{transform_indices = @transform_0, window_bounds = array<i64: 1, 64, 256>}, {pipeline_mode = #tpu.pipeline_mode<synchronous>, transform_indices = @transform_1, window_bounds = array<i64: 64, 4>}, {pipeline_mode = #tpu.pipeline_mode<synchronous>, transform_indices = @transform_2, window_bounds = array<i64: 4, 64>}, {transform_indices = @transform_3, window_bounds = array<i64: 1, 64, 256>}]} {
    %c0 = arith.constant 0 : index
    %c0_0 = arith.constant 0 : index
    %c0_1 = arith.constant 0 : index
    %0 = vector.load %arg1[%c0, %c0_0, %c0_1] : memref<1x64x256xf32, #tpu.memory_space<vmem>>, vector<1x64x256xf32>
    %cst = arith.constant dense<0.000000e+00> : vector<1x64xf32>
    %1 = vector.multi_reduction <add>, %0, %cst [2] : vector<1x64x256xf32> to vector<1x64xf32>
    %cst_2 = arith.constant 3.906250e-03 : f32
    %2 = vector.broadcast %cst_2 : f32 to vector<1x64xf32>
    %3 = arith.mulf %1, %2 : vector<1x64xf32>
    %c0_3 = arith.constant 0 : index
    %c0_4 = arith.constant 0 : index
    %c0_5 = arith.constant 0 : index
    %4 = vector.load %arg1[%c0_3, %c0_4, %c0_5] : memref<1x64x256xf32, #tpu.memory_space<vmem>>, vector<1x64x256xf32>
    %cst_6 = arith.constant dense<0xFF800000> : vector<1x64xf32>
    %5 = vector.multi_reduction <maximumf>, %4, %cst_6 [2] : vector<1x64x256xf32> to vector<1x64xf32>
    %6 = tpu.concatenate %3, %5 in 0 : vector<1x64xf32>, vector<1x64xf32> -> vector<2x64xf32>
    %c0_7 = arith.constant 0 : index
    %c0_8 = arith.constant 0 : index
    %7 = vector.load %arg2[%c0_7, %c0_8] : memref<64x4xf32, #tpu.memory_space<vmem>>, vector<64x4xf32>
    %cst_9 = arith.constant dense<0.000000e+00> : vector<2x4xf32>
    %8 = tpu.matmul %6, %7, %cst_9 {dimension_numbers = #tpu.dot_dimension_numbers<[1], [0], [0], [1], [0, 0, 1, 1], [], []>} : vector<2x64xf32>, vector<64x4xf32>, vector<2x4xf32> -> vector<2x4xf32>
    %cst_10 = arith.constant 0.000000e+00 : f32
    %9 = vector.broadcast %cst_10 : f32 to vector<2x4xf32>
    %10 = arith.maximumf %8, %9 : vector<2x4xf32>
    %c0_11 = arith.constant 0 : index
    %c0_12 = arith.constant 0 : index
    %11 = vector.load %arg3[%c0_11, %c0_12] : memref<4x64xf32, #tpu.memory_space<vmem>>, vector<4x64xf32>
    %cst_13 = arith.constant dense<0.000000e+00> : vector<2x64xf32>
    %12 = tpu.matmul %10, %11, %cst_13 {dimension_numbers = #tpu.dot_dimension_numbers<[1], [0], [0], [1], [0, 0, 1, 1], [], []>} : vector<2x4xf32>, vector<4x64xf32>, vector<2x64xf32> -> vector<2x64xf32>
    %13 = vector.extract_strided_slice %12 {offsets = [0, 0], sizes = [1, 64], strides = [1, 1]} : vector<2x64xf32> to vector<1x64xf32>
    %14 = vector.extract_strided_slice %12 {offsets = [1, 0], sizes = [1, 64], strides = [1, 1]} : vector<2x64xf32> to vector<1x64xf32>
    %15 = arith.addf %13, %14 : vector<1x64xf32>
    %16 = arith.negf %15 : vector<1x64xf32>
    %17 = math.exp %16 : vector<1x64xf32>
    %cst_14 = arith.constant 1.000000e+00 : f32
    %18 = vector.broadcast %cst_14 : f32 to vector<1x64xf32>
    %19 = arith.addf %18, %17 : vector<1x64xf32>
    %20 = arith.divf %18, %19 : vector<1x64xf32>
    %c0_15 = arith.constant 0 : index
    %c0_16 = arith.constant 0 : index
    %c0_17 = arith.constant 0 : index
    %21 = vector.load %arg1[%c0_15, %c0_16, %c0_17] : memref<1x64x256xf32, #tpu.memory_space<vmem>>, vector<1x64x256xf32>
    %22 = vector.shape_cast %20 : vector<1x64xf32> to vector<1x64x1xf32>
    %23 = vector.broadcast %22 : vector<1x64x1xf32> to vector<1x64x256xf32>
    %24 = arith.mulf %21, %23 : vector<1x64x256xf32>
    %c0_18 = arith.constant 0 : index
    %c0_19 = arith.constant 0 : index
    %c0_20 = arith.constant 0 : index
    %25 = vector.load %arg4[%c0_18, %c0_19, %c0_20] : memref<1x64x256xf32, #tpu.memory_space<vmem>>, vector<1x64x256xf32>
    tpu.vector_store %arg4[%c0_18, %c0_19, %c0_20], %24 {strides = array<i32>} : memref<1x64x256xf32, #tpu.memory_space<vmem>>, vector<1x64x256xf32>,
    return
  }
  func.func @transform_0(%arg0: i32) -> (i32, i32, i32) {
    %c0_i32 = arith.constant 0 : i32
    %c0_i32_0 = arith.constant 0 : i32
    %c0_i32_1 = arith.constant 0 : i32
    return %arg0, %c0_i32, %c0_i32_0 : i32, i32, i32
  }
  func.func @transform_1(%arg0: i32) -> (i32, i32) {
    %c0_i32 = arith.constant 0 : i32
    %c0_i32_0 = arith.constant 0 : i32
    %c0_i32_1 = arith.constant 0 : i32
    return %c0_i32, %c0_i32_0 : i32, i32
  }
  func.func @transform_2(%arg0: i32) -> (i32, i32) {
    %c0_i32 = arith.constant 0 : i32
    %c0_i32_0 = arith.constant 0 : i32
    %c0_i32_1 = arith.constant 0 : i32
    return %c0_i32, %c0_i32_0 : i32, i32
  }
  func.func @transform_3(%arg0: i32) -> (i32, i32, i32) {
    %c0_i32 = arith.constant 0 : i32
    %c0_i32_0 = arith.constant 0 : i32
    %c0_i32_1 = arith.constant 0 : i32
    return %arg0, %c0_i32, %c0_i32_0 : i32, i32, i32
  }
}

</mosaic_0001>

<llo_original>
// kernel: channel_attention_forward.1
$region0: #{channel_attention_forward.1}
  #allocation0 [shape = 'u32[]', space=smem, size = 0x4, offset = 0x4, fixed_abs, tag = 'smem constant byte address 0x4 - core index']
  #allocation1 [shape = 'u32[144,128]{1,0:T(1,128)}', space=vmem, size = 0x12000, scoped, tag = 'internal scratch']
  %s0 = inlined_call_operand.vmem [shape: f32[2,64,256], index: 0, kind: input, shape index: {}]
  %s1 = inlined_call_operand.vmem [shape: f32[64,4], index: 1, kind: input, shape index: {}]
  %s2 = inlined_call_operand.vmem [shape: f32[4,64], index: 2, kind: input, shape index: {}]
  %s3 = inlined_call_operand.vmem [shape: f32[2,64,256], index: 3, kind: output, shape index: {}]
  %s4 = sld [smem:[#allocation0]]
  $region45: #{channel_attention_forward.1} parent=0
    _
  %s6 = ssub.s32 1, %s4
  %s7 = scalar_select 0, %s6, %s4
  loop: start=0, step=1, limit=4
  $region2: #{channel_attention_forward.1} parent=0 // loop_pre_header
    _
  $region3: #{channel_attention_forward.1} parent=0 // loop_header
    %s9 = sphi 0, %s13
    %p10 = scmp.ge.s32.totalorder %s9, 4
    %s19 = sphi 0, %s21
    %s22 = sphi 0, %s19
    %s23 = sphi 0, %s22
    %s39 = sphi 0, %s23
    %s43 = sphi 0, %s43
    %s45 = sphi 0, %s43
    %s46 = sphi 0, %s45
    %s60 = sphi 0, %s46
    %s64 = sphi 0, %s64
    %s66 = sphi 0, %s64
    %s67 = sphi 0, %s66
    %s81 = sphi 0, %s67
    %s87 = sphi 0, %s89
    %s90 = sphi 0, %s87
    %s91 = sphi 0, %s90
    %s107 = sphi 0, %s91
  $region4: #{channel_attention_forward.1} parent=0 // loop_header_branch
    %12 = sbr.rel (%p10) target = $region8
  $region5: #{channel_attention_forward.1} parent=0 // loop_body
    %s14 = ssub.s32 %s9, 1
    %s15 = ssub.s32 %s9, 2
    %s16 = sadd.s32 %s9, 1
    %s17 = ssub.s32 %s9, %s16
    %p18 = scmp.eq.s32.totalorder %s17, 0
    %s20 = sadd.s32 %s19, 1
    %s21 = scalar_select %p18, %s19, %s20
    %p24 = pneg %p18
    %p25 = scmp.eq.s32.totalorder %s9, 1
    %p26 = por %p24, %p25
    %p27 = scmp.ne.s32.totalorder %s19, %s22
    %p28 = scmp.eq.s32.totalorder %s9, 0
    %p29 = por %p27, %p28
    %p30 = scmp.ne.s32.totalorder %s19, %s22
    %p31 = scmp.eq.s32.totalorder %s14, 1
    %p32 = por %p30, %p31
    %p33 = scmp.ne.s32.totalorder %s22, %s23
    %p34 = scmp.eq.s32.totalorder %s14, 0
    %p35 = por %p33, %p34
    %p36 = scmp.ne.s32.totalorder %s22, %s23
    %p37 = scmp.eq.s32.totalorder %s15, 1
    %p38 = por %p36, %p37
    %p40 = scmp.ne.s32.totalorder %s23, %s39
    %p41 = scmp.eq.s32.totalorder %s15, 0
    %p42 = por %p40, %p41
    %s44 = sadd.s32 %s43, 1
    %p47 = scmp.eq.s32.totalorder %s9, 1
    %p48 = scmp.ne.s32.totalorder %s43, %s45
    %p49 = scmp.eq.s32.totalorder %s9, 0
    %p50 = por %p48, %p49
    %p51 = scmp.ne.s32.totalorder %s43, %s45
    %p52 = scmp.eq.s32.totalorder %s14, 1
    %p53 = por %p51, %p52
    %p54 = scmp.ne.s32.totalorder %s45, %s46
    %p55 = scmp.eq.s32.totalorder %s14, 0
    %p56 = por %p54, %p55
    %p57 = scmp.ne.s32.totalorder %s45, %s46
    %p58 = scmp.eq.s32.totalorder %s15, 1
    %p59 = por %p57, %p58
    %p61 = scmp.ne.s32.totalorder %s46, %s60
    %p62 = scmp.eq.s32.totalorder %s15, 0
    %p63 = por %p61, %p62
    %s65 = sadd.s32 %s64, 1
    %p68 = scmp.eq.s32.totalorder %s9, 1
    %p69 = scmp.ne.s32.totalorder %s64, %s66
    %p70 = scmp.eq.s32.totalorder %s9, 0
    %p71 = por %p69, %p70
    %p72 = scmp.ne.s32.totalorder %s64, %s66
    %p73 = scmp.eq.s32.totalorder %s14, 1
    %p74 = por %p72, %p73
    %p75 = scmp.ne.s32.totalorder %s66, %s67
    %p76 = scmp.eq.s32.totalorder %s14, 0
    %p77 = por %p75, %p76
    %p78 = scmp.ne.s32.totalorder %s66, %s67
    %p79 = scmp.eq.s32.totalorder %s15, 1
    %p80 = por %p78, %p79
    %p82 = scmp.ne.s32.totalorder %s67, %s81
    %p83 = scmp.eq.s32.totalorder %s15, 0
    %p84 = por %p82, %p83
    %s85 = ssub.s32 %s9, %s16
    %p86 = scmp.eq.s32.totalorder %s85, 0
    %s88 = sadd.s32 %s87, 1
    %s89 = scalar_select %p86, %s87, %s88
    %p92 = pneg %p86
    %p93 = scmp.eq.s32.totalorder %s9, 1
    %p94 = por %p92, %p93
    %p95 = scmp.ne.s32.totalorder %s87, %s90
    %p96 = scmp.eq.s32.totalorder %s9, 0
    %p97 = por %p95, %p96
    %p98 = scmp.ne.s32.totalorder %s87, %s90
    %p99 = scmp.eq.s32.totalorder %s14, 1
    %p100 = por %p98, %p99
    %p101 = scmp.ne.s32.totalorder %s90, %s91
    %p102 = scmp.eq.s32.totalorder %s14, 0
    %p103 = por %p101, %p102
    %p104 = scmp.ne.s32.totalorder %s90, %s91
    %p105 = scmp.eq.s32.totalorder %s15, 1
    %p106 = por %p104, %p105
    %p108 = scmp.ne.s32.totalorder %s91, %s107
    %p109 = scmp.eq.s32.totalorder %s15, 0
    %p110 = por %p108, %p109
    %p111 = scmp.le.s32.totalorder 1, %s9
    %p112 = scmp.lt.s32.totalorder %s9, 3
    %p113 = pnand %p111, %p112
    %p114 = pneg %p113
    // Predicated region
    $region9: #{channel_attention_forward.1} parent=5 // pred_check
      _
    $region10: #{channel_attention_forward.1} parent=5 // pred_check_branch
      %116 = sbr.rel (%p113) target = $region12
    $region11: #{channel_attention_forward.1} parent=5 // pred_region
      %s117 = ssub.s32 %s9, 1
      // Predicated region
      $region13: #{channel_attention_forward.1} parent=11 // pred_check
        %p118 = pneg %p56
      $region14: #{channel_attention_forward.1} parent=11 // pred_check_branch
        %120 = sbr.rel (%p118) target = $region16
      $region15: #{channel_attention_forward.1} parent=11 // pred_region
        _
      $region16: #{channel_attention_forward.1} parent=11 // pred_fallthru
        _
      // Predicated region
      $region17: #{channel_attention_forward.1} parent=11 // pred_check
        %p121 = pneg %p77
      $region18: #{channel_attention_forward.1} parent=11 // pred_check_branch
        %123 = sbr.rel (%p121) target = $region20
      $region19: #{channel_attention_forward.1} parent=11 // pred_region
        _
      $region20: #{channel_attention_forward.1} parent=11 // pred_fallthru
        _
    $region12: #{channel_attention_forward.1} parent=5 // pred_fallthru
      _
    %p124 = scmp.lt.s32.totalorder %s9, 2
    // Predicated region
    $region21: #{channel_attention_forward.1} parent=5 // pred_check
      %p125 = pneg %p124
    $region22: #{channel_attention_forward.1} parent=5 // pred_check_branch
      %127 = sbr.rel (%p125) target = $region24
    $region23: #{channel_attention_forward.1} parent=5 // pred_region
      // Predicated region
      $region25: #{channel_attention_forward.1} parent=23 // pred_check
        %p128 = pneg %p29
      $region26: #{channel_attention_forward.1} parent=23 // pred_check_branch
        %130 = sbr.rel (%p128) target = $region28
      $region27: #{channel_attention_forward.1} parent=23 // pred_region
        %p131 = scmp.lt.s32.totalorder %s9, 1
        %s132 = scalar_select %p131, %s9, 1
        %s133 = smul.addr %s132, 16
        %s134 = smul.addr %s133, 8
        %s135 = scalar_lea.vmem %s0, %s134
      $region28: #{channel_attention_forward.1} parent=23 // pred_fallthru
        _
    $region24: #{channel_attention_forward.1} parent=5 // pred_fallthru
      _
    %p136 = scmp.le.s32.totalorder 1, %s9
    %p137 = scmp.lt.s32.totalorder %s9, 3
    %p138 = pnand %p136, %p137
    %p139 = pneg %p138
    // Predicated region
    $region29: #{channel_attention_forward.1} parent=5 // pred_check
      _
    $region30: #{channel_attention_forward.1} parent=5 // pred_check_branch
      %141 = sbr.rel (%p138) target = $region32
    $region31: #{channel_attention_forward.1} parent=5 // pred_region
      %s142 = ssub.s32 %s9, 1
      %p143 = scmp.lt.s32.totalorder %s14, 1
      %s144 = scalar_select %p143, %s14, 1
      %s145 = smul.addr %s144, 16
      %s146 = smul.addr %s145, 8
      %s147 = scalar_lea.vmem %s0, %s146
      %p148 = pneg %p35
      %p149 = pneg %p32
      %p150 = pneg %p56
      %p151 = pneg %p53
      %p152 = pneg %p77
      %p153 = pneg %p74
      %p154 = pneg %p103
      %p155 = pneg %p100
      %p156 = scmp.lt.s32.totalorder %s14, 1
      %s157 = scalar_select %p156, %s14, 1
      %s158 = smul.addr %s157, 16
      %s159 = smul.addr %s158, 8
      %s160 = scalar_lea.vmem %s3, %s159
      %p161 = scmp.lt.s32.totalorder %s14, 1
      %s162 = scalar_select %p161, %s14, 1
      %s163 = smul.addr %s162, 16
      %s164 = smul.addr %s163, 8
      %s165 = scalar_lea.vmem %s0, %s164
      %p166 = scmp.lt.s32.totalorder %s14, 1
      %s167 = scalar_select %p166, %s14, 1
      %s168 = smul.addr %s167, 16
      %s169 = smul.addr %s168, 8
      %s170 = scalar_lea.vmem %s3, %s169
      %v171 = vld [vmem:[%s165] sm:$0xff]
      %v172 = vld [vmem:[%s165 + $0x8] sm:$0xff]
      %v173 = vld [vmem:[%s165 + $0x10] sm:$0xff]
      %v174 = vld [vmem:[%s165 + $0x18] sm:$0xff]
      %v175 = vld [vmem:[%s165 + $0x20] sm:$0xff]
      %v176 = vld [vmem:[%s165 + $0x28] sm:$0xff]
      %v177 = vld [vmem:[%s165 + $0x30] sm:$0xff]
      %v178 = vld [vmem:[%s165 + $0x38] sm:$0xff]
      %v179 = vld [vmem:[%s165 + $0x40] sm:$0xff]
      %v180 = vld [vmem:[%s165 + $0x48] sm:$0xff]
      %v181 = vld [vmem:[%s165 + $0x50] sm:$0xff]
      %v182 = vld [vmem:[%s165 + $0x58] sm:$0xff]
      %v183 = vld [vmem:[%s165 + $0x60] sm:$0xff]
      %v184 = vld [vmem:[%s165 + $0x68] sm:$0xff]
      %v185 = vld [vmem:[%s165 + $0x70] sm:$0xff]
      %v186 = vld [vmem:[%s165 + $0x78] sm:$0xff]
      %v187 = vadd.f32 %v171, %v172
      %188 = vadd.xlane.f32.xlu0 %v187
      %v189 = vpop.xlane.xlu0 %188
      %v190 = vadd.f32 %v173, %v174
      %191 = vadd.xlane.f32.xlu0 %v190
      %v192 = vpop.xlane.xlu0 %191
      %v193 = vadd.f32 %v175, %v176
      %194 = vadd.xlane.f32.xlu0 %v193
      %v195 = vpop.xlane.xlu0 %194
      %v196 = vadd.f32 %v177, %v178
      %197 = vadd.xlane.f32.xlu0 %v196
      %v198 = vpop.xlane.xlu0 %197
      %v199 = vadd.f32 %v179, %v180
      %200 = vadd.xlane.f32.xlu0 %v199
      %v201 = vpop.xlane.xlu0 %200
      %v202 = vadd.f32 %v181, %v182
      %203 = vadd.xlane.f32.xlu0 %v202
      %v204 = vpop.xlane.xlu0 %203
      %v205 = vadd.f32 %v183, %v184
      %206 = vadd.xlane.f32.xlu0 %v205
      %v207 = vpop.xlane.xlu0 %206
      %v208 = vadd.f32 %v185, %v186
      %209 = vadd.xlane.f32.xlu0 %v208
      %v210 = vpop.xlane.xlu0 %209
      %v211 = vmul.f32 %v189, 0.00390625
      %v212 = vmul.f32 %v192, 0.00390625
      %v213 = vmul.f32 %v195, 0.00390625
      %v214 = vmul.f32 %v198, 0.00390625
      %v215 = vmul.f32 %v201, 0.00390625
      %v216 = vmul.f32 %v204, 0.00390625
      %v217 = vmul.f32 %v207, 0.00390625
      %v218 = vmul.f32 %v210, 0.00390625
      %v219 = vmax.f32 %v171, %v172
      %220 = vmax.xlane.f32.xlu0 %v219
      %v221 = vpop.xlane.xlu0 %220
      %v222 = vmax.f32 %v173, %v174
      %223 = vmax.xlane.f32.xlu0 %v222
      %v224 = vpop.xlane.xlu0 %223
      %v225 = vmax.f32 %v175, %v176
      %226 = vmax.xlane.f32.xlu0 %v225
      %v227 = vpop.xlane.xlu0 %226
      %v228 = vmax.f32 %v177, %v178
      %229 = vmax.xlane.f32.xlu0 %v228
      %v230 = vpop.xlane.xlu0 %229
      %v231 = vmax.f32 %v179, %v180
      %232 = vmax.xlane.f32.xlu0 %v231
      %v233 = vpop.xlane.xlu0 %232
      %v234 = vmax.f32 %v181, %v182
      %235 = vmax.xlane.f32.xlu0 %v234
      %v236 = vpop.xlane.xlu0 %235
      %v237 = vmax.f32 %v183, %v184
      %238 = vmax.xlane.f32.xlu0 %v237
      %v239 = vpop.xlane.xlu0 %238
      %v240 = vmax.f32 %v185, %v186
      %241 = vmax.xlane.f32.xlu0 %v240
      %v242 = vpop.xlane.xlu0 %241
      %v251 = vlaneseq
      %v252 = vand.u32 %v251, 127
      %v253 = vlaneseq
      %v254 = vshrl.u32 %v253, 7
      %v255 = vsub.s32 %v252, %v254
      %v256 = vrot.slane %v211, %v255
      %v257 = vadd.s32 %v252, 4294967288
      %v258 = vlaneseq
      %v259 = vshrl.u32 %v258, 7
      %v260 = vsub.s32 %v257, %v259
      %v261 = vrot.slane %v212, %v260
      %vm262 = vcmask 130112
      %v263 = vsel %vm262, %v261, %v256
      %v264 = vadd.s32 %v252, 4294967280
      %v265 = vlaneseq
      %v266 = vshrl.u32 %v265, 7
      %v267 = vsub.s32 %v264, %v266
      %v268 = vrot.slane %v213, %v267
      %vm269 = vcmask 195712
      %v270 = vsel %vm269, %v268, %v263
      %v271 = vadd.s32 %v252, 4294967272
      %v272 = vlaneseq
      %v273 = vshrl.u32 %v272, 7
      %v274 = vsub.s32 %v271, %v273
      %v275 = vrot.slane %v214, %v274
      %vm276 = vcmask 261312
      %v277 = vsel %vm276, %v275, %v270
      %v278 = vadd.s32 %v252, 4294967264
      %v279 = vlaneseq
      %v280 = vshrl.u32 %v279, 7
      %v281 = vsub.s32 %v278, %v280
      %v282 = vrot.slane %v215, %v281
      %vm283 = vcmask 326912
      %v284 = vsel %vm283, %v282, %v277
      %v285 = vadd.s32 %v252, 4294967256
      %v286 = vlaneseq
      %v287 = vshrl.u32 %v286, 7
      %v288 = vsub.s32 %v285, %v287
      %v289 = vrot.slane %v216, %v288
      %vm290 = vcmask 392512
      %v291 = vsel %vm290, %v289, %v284
      %v292 = vadd.s32 %v252, 4294967248
      %v293 = vlaneseq
      %v294 = vshrl.u32 %v293, 7
      %v295 = vsub.s32 %v292, %v294
      %v296 = vrot.slane %v217, %v295
      %vm297 = vcmask 458112
      %v298 = vsel %vm297, %v296, %v291
      %v299 = vadd.s32 %v252, 4294967240
      %v300 = vlaneseq
      %v301 = vshrl.u32 %v300, 7
      %v302 = vsub.s32 %v299, %v301
      %v303 = vrot.slane %v218, %v302
      %vm304 = vcmask 523712
      %v305 = vsel %vm304, %v303, %v298
      %v315 = vlaneseq
      %v316 = vshrl.u32 %v315, 7
      %v317 = vsub.s32 %v252, %v316
      %v318 = vrot.slane %v221, %v317
      %v319 = vlaneseq
      %v320 = vshrl.u32 %v319, 7
      %v321 = vsub.s32 %v257, %v320
      %v322 = vrot.slane %v224, %v321
      %v323 = vsel %vm262, %v322, %v318
      %v324 = vlaneseq
      %v325 = vshrl.u32 %v324, 7
      %v326 = vsub.s32 %v264, %v325
      %v327 = vrot.slane %v227, %v326
      %v328 = vsel %vm269, %v327, %v323
      %v329 = vlaneseq
      %v330 = vshrl.u32 %v329, 7
      %v331 = vsub.s32 %v271, %v330
      %v332 = vrot.slane %v230, %v331
      %v333 = vsel %vm276, %v332, %v328
      %v334 = vlaneseq
      %v335 = vshrl.u32 %v334, 7
      %v336 = vsub.s32 %v278, %v335
      %v337 = vrot.slane %v233, %v336
      %v338 = vsel %vm283, %v337, %v333
      %v339 = vlaneseq
      %v340 = vshrl.u32 %v339, 7
      %v341 = vsub.s32 %v285, %v340
      %v342 = vrot.slane %v236, %v341
      %v343 = vsel %vm290, %v342, %v338
      %v344 = vlaneseq
      %v345 = vshrl.u32 %v344, 7
      %v346 = vsub.s32 %v292, %v345
      %v347 = vrot.slane %v239, %v346
      %v348 = vsel %vm297, %v347, %v343
      %v349 = vlaneseq
      %v350 = vshrl.u32 %v349, 7
      %v351 = vsub.s32 %v299, %v350
      %v352 = vrot.slane %v242, %v351
      %v353 = vsel %vm304, %v352, %v348
      %vm355 = vcmask 1040384
      %v356 = vsel %vm355, %v305, %v353
      %v357 = vld [vmem:[%s1] sm:$0xff]
      %v358 = vld [vmem:[%s1 + $0x8] sm:$0xff]
      %v359 = vld [vmem:[%s1 + $0x10] sm:$0xff]
      %v360 = vld [vmem:[%s1 + $0x18] sm:$0xff]
      %v361 = vld [vmem:[%s1 + $0x20] sm:$0xff]
      %v362 = vld [vmem:[%s1 + $0x28] sm:$0xff]
      %v363 = vld [vmem:[%s1 + $0x30] sm:$0xff]
      %v364 = vld [vmem:[%s1 + $0x38] sm:$0xff]
      %vm365 = vcmask 523264
      %v367 = vsel %vm365, %v356, 0
      %369 = vmatprep.subr.mxu0 0.0
      %370 = vmatpush1.msra.mxu0 %v357
      %371 = vmatprep.subr.mxu0 0.0
      %372 = vmatpush1.msra.mxu0 %v358
      %373 = vmatprep.subr.mxu0 0.0
      %374 = vmatpush1.msra.mxu0 %v359
      %375 = vmatprep.subr.mxu0 0.0
      %376 = vmatpush1.msra.mxu0 %v360
      %377 = vmatprep.subr.mxu0 0.0
      %378 = vmatpush1.msra.mxu0 %v361
      %379 = vmatprep.subr.mxu0 0.0
      %380 = vmatpush1.msra.mxu0 %v362
      %381 = vmatprep.subr.mxu0 0.0
      %382 = vmatpush1.msra.mxu0 %v363
      %383 = vmatprep.subr.mxu0 0.0
      %384 = vmatpush1.msra.mxu0 %v364
      %385 = vmatprep.subr.mxu0 0.0
      %386 = vmatpush1.msra.mxu0 0.0
      %387 = vmatprep.subr.mxu0 0.0
      %388 = vmatpush1.msra.mxu0 0.0
      %389 = vmatprep.subr.mxu0 0.0
      %390 = vmatpush1.msra.mxu0 0.0
      %391 = vmatprep.subr.mxu0 0.0
      %392 = vmatpush1.msra.mxu0 0.0
      %393 = vmatprep.subr.mxu0 0.0
      %394 = vmatpush1.msra.mxu0 0.0
      %395 = vmatprep.subr.mxu0 0.0
      %396 = vmatpush1.msra.mxu0 0.0
      %397 = vmatprep.subr.mxu0 0.0
      %398 = vmatpush1.msra.mxu0 0.0
      %399 = vmatprep.subr.mxu0 0.0
      %400 = vmatpush1.msra.mxu0 0.0
      %401 = vmatprep.subr.mxu0 0.0
      %402 = vmatpush1.msra.mxu0 0.0
      %403 = vmatprep.subr.mxu0 0.0
      %404 = vmatpush1.msra.mxu0 0.0
      %405 = vmatprep.subr.mxu0 0.0
      %406 = vmatpush1.msra.mxu0 0.0
      %407 = vmatprep.subr.mxu0 0.0
      %408 = vmatpush1.msra.mxu0 0.0
      %409 = vmatprep.subr.mxu0 0.0
      %410 = vmatpush1.msra.mxu0 0.0
      %411 = vmatprep.subr.mxu0 0.0
      %412 = vmatpush1.msra.mxu0 0.0
      %413 = vmatprep.subr.mxu0 0.0
      %414 = vmatpush1.msra.mxu0 0.0
      %415 = vmatprep.subr.mxu0 0.0
      %416 = vmatpush1.msra.mxu0 0.0
      %417 = vmatprep.subr.mxu0 0.0
      %418 = vmatpush1.msra.mxu0 0.0
      %419 = vmatprep.subr.mxu0 0.0
      %420 = vmatpush1.msra.mxu0 0.0
      %421 = vmatprep.subr.mxu0 0.0
      %422 = vmatpush1.msra.mxu0 0.0
      %423 = vmatprep.subr.mxu0 0.0
      %424 = vmatpush1.msra.mxu0 0.0
      %425 = vmatprep.subr.mxu0 0.0
      %426 = vmatpush1.msra.mxu0 0.0
      %427 = vmatprep.subr.mxu0 0.0
      %428 = vmatpush1.msra.mxu0 0.0
      %429 = vmatprep.subr.mxu0 0.0
      %430 = vmatpush1.msra.mxu0 0.0
      %431 = vmatprep.subr.mxu0 0.0
      %432 = vmatpush1.msra.mxu0 0.0
      %433 = vmatprep.mubr.f32.mxu0 0.0
      %434 = vmatmul.mubr.f32.gmra.mrb[0].mxu0 %v367
      %v435 = vpop.f32.mrb[0].mxu0
      %v436 = vadd.f32 0.0, %v435
      %v437 = vpop.f32.mrb[0].mxu0
      %438 = vdwg.mxu0
      %v439 = vmax.f32 %v436, 0.0
      %v440 = vld [vmem:[%s2] sm:$0xf]
      %vm441 = vcmask 31744
      %v443 = vsel %vm441, %v439, 0
      %vm445 = vcmask 1043456
      %v447 = vsel %vm445, %v440, 0
      %449 = vmatprep.subr.mxu0 0.0
      %450 = vmatpush1.msra.mxu0 %v447
      %451 = vmatprep.subr.mxu0 0.0
      %452 = vmatpush1.msra.mxu0 0.0
      %453 = vmatprep.subr.mxu0 0.0
      %454 = vmatpush1.msra.mxu0 0.0
      %455 = vmatprep.subr.mxu0 0.0
      %456 = vmatpush1.msra.mxu0 0.0
      %457 = vmatprep.subr.mxu0 0.0
      %458 = vmatpush1.msra.mxu0 0.0
      %459 = vmatprep.subr.mxu0 0.0
      %460 = vmatpush1.msra.mxu0 0.0
      %461 = vmatprep.subr.mxu0 0.0
      %462 = vmatpush1.msra.mxu0 0.0
      %463 = vmatprep.subr.mxu0 0.0
      %464 = vmatpush1.msra.mxu0 0.0
      %465 = vmatprep.subr.mxu0 0.0
      %466 = vmatpush1.msra.mxu0 0.0
      %467 = vmatprep.subr.mxu0 0.0
      %468 = vmatpush1.msra.mxu0 0.0
      %469 = vmatprep.subr.mxu0 0.0
      %470 = vmatpush1.msra.mxu0 0.0
      %471 = vmatprep.subr.mxu0 0.0
      %472 = vmatpush1.msra.mxu0 0.0
      %473 = vmatprep.subr.mxu0 0.0
      %474 = vmatpush1.msra.mxu0 0.0
      %475 = vmatprep.subr.mxu0 0.0
      %476 = vmatpush1.msra.mxu0 0.0
      %477 = vmatprep.subr.mxu0 0.0
      %478 = vmatpush1.msra.mxu0 0.0
      %479 = vmatprep.subr.mxu0 0.0
      %480 = vmatpush1.msra.mxu0 0.0
      %481 = vmatprep.subr.mxu0 0.0
      %482 = vmatpush1.msra.mxu0 0.0
      %483 = vmatprep.subr.mxu0 0.0
      %484 = vmatpush1.msra.mxu0 0.0
      %485 = vmatprep.subr.mxu0 0.0
      %486 = vmatpush1.msra.mxu0 0.0
      %487 = vmatprep.subr.mxu0 0.0
      %488 = vmatpush1.msra.mxu0 0.0
      %489 = vmatprep.subr.mxu0 0.0
      %490 = vmatpush1.msra.mxu0 0.0
      %491 = vmatprep.subr.mxu0 0.0
      %492 = vmatpush1.msra.mxu0 0.0
      %493 = vmatprep.subr.mxu0 0.0
      %494 = vmatpush1.msra.mxu0 0.0
      %495 = vmatprep.subr.mxu0 0.0
      %496 = vmatpush1.msra.mxu0 0.0
      %497 = vmatprep.subr.mxu0 0.0
      %498 = vmatpush1.msra.mxu0 0.0
      %499 = vmatprep.subr.mxu0 0.0
      %500 = vmatpush1.msra.mxu0 0.0
      %501 = vmatprep.subr.mxu0 0.0
      %502 = vmatpush1.msra.mxu0 0.0
      %503 = vmatprep.subr.mxu0 0.0
      %504 = vmatpush1.msra.mxu0 0.0
      %505 = vmatprep.subr.mxu0 0.0
      %506 = vmatpush1.msra.mxu0 0.0
      %507 = vmatprep.subr.mxu0 0.0
      %508 = vmatpush1.msra.mxu0 0.0
      %509 = vmatprep.subr.mxu0 0.0
      %510 = vmatpush1.msra.mxu0 0.0
      %511 = vmatprep.subr.mxu0 0.0
      %512 = vmatpush1.msra.mxu0 0.0
      %513 = vmatprep.mubr.f32.mxu0 0.0
      %514 = vmatmul.mubr.f32.gmra.mrb[0].mxu0 %v443
      %v515 = vpop.f32.mrb[0].mxu0
      %v516 = vadd.f32 0.0, %v515
      %v517 = vpop.f32.mrb[0].mxu0
      %518 = vdwg.mxu0
      %v520 = vrot.slane %v516, 1
      %v522 = vadd.f32 %v516, %v520
      %v523 = vxor.u32 %v522, 2147483648
      %v524 = vmul.f32 %v523, 1.442695
      %v525 = vpow.pop %v524
      %v526 = vadd.f32 %v525, 1.0
      %v527 = vrcp.pop %v526
      %v528 = vmul.f32 1.0, %v527
      %v529 = vlaneseq
      %v530 = vshrl.u32 %v529, 7
      %v531 = vsub.s32 0, %v530
      %v532 = vrot.slane %v528, %v531
      %534 = vbcast.lane.b32.xlu0 %v532, 256
      %v535 = vpop.permute.xlu0 %534
      %s537 = sor.u32 256, 8
      %538 = vbcast.lane.b32.xlu0 %v532, %s537
      %v539 = vpop.permute.xlu0 %538
      %s541 = sor.u32 256, 16
      %542 = vbcast.lane.b32.xlu0 %v532, %s541
      %v543 = vpop.permute.xlu0 %542
      %s545 = sor.u32 256, 24
      %546 = vbcast.lane.b32.xlu0 %v532, %s545
      %v547 = vpop.permute.xlu0 %546
      %s549 = sor.u32 256, 32
      %550 = vbcast.lane.b32.xlu0 %v532, %s549
      %v551 = vpop.permute.xlu0 %550
      %s553 = sor.u32 256, 40
      %554 = vbcast.lane.b32.xlu0 %v532, %s553
      %v555 = vpop.permute.xlu0 %554
      %s557 = sor.u32 256, 48
      %558 = vbcast.lane.b32.xlu0 %v532, %s557
      %v559 = vpop.permute.xlu0 %558
      %s561 = sor.u32 256, 56
      %562 = vbcast.lane.b32.xlu0 %v532, %s561
      %v563 = vpop.permute.xlu0 %562
      %v564 = vmul.f32 %v171, %v535
      %v565 = vmul.f32 %v172, %v535
      %v566 = vmul.f32 %v173, %v539
      %v567 = vmul.f32 %v174, %v539
      %v568 = vmul.f32 %v175, %v543
      %v569 = vmul.f32 %v176, %v543
      %v570 = vmul.f32 %v177, %v547
      %v571 = vmul.f32 %v178, %v547
      %v572 = vmul.f32 %v179, %v551
      %v573 = vmul.f32 %v180, %v551
      %v574 = vmul.f32 %v181, %v555
      %v575 = vmul.f32 %v182, %v555
      %v576 = vmul.f32 %v183, %v559
      %v577 = vmul.f32 %v184, %v559
      %v578 = vmul.f32 %v185, %v563
      %v579 = vmul.f32 %v186, %v563
      %580 = vst [vmem:[%s170] sm:$0xff] %v564
      %581 = vst [vmem:[%s170 + $0x8] sm:$0xff] %v565
      %582 = vst [vmem:[%s170 + $0x10] sm:$0xff] %v566
      %583 = vst [vmem:[%s170 + $0x18] sm:$0xff] %v567
      %584 = vst [vmem:[%s170 + $0x20] sm:$0xff] %v568
      %585 = vst [vmem:[%s170 + $0x28] sm:$0xff] %v569
      %586 = vst [vmem:[%s170 + $0x30] sm:$0xff] %v570
      %587 = vst [vmem:[%s170 + $0x38] sm:$0xff] %v571
      %588 = vst [vmem:[%s170 + $0x40] sm:$0xff] %v572
      %589 = vst [vmem:[%s170 + $0x48] sm:$0xff] %v573
      %590 = vst [vmem:[%s170 + $0x50] sm:$0xff] %v574
      %591 = vst [vmem:[%s170 + $0x58] sm:$0xff] %v575
      %592 = vst [vmem:[%s170 + $0x60] sm:$0xff] %v576
      %593 = vst [vmem:[%s170 + $0x68] sm:$0xff] %v577
      %594 = vst [vmem:[%s170 + $0x70] sm:$0xff] %v578
      %595 = vst [vmem:[%s170 + $0x78] sm:$0xff] %v579
      %p596 = scmp.lt.s32.totalorder %s14, 1
      %s597 = scalar_select %p596, %s14, 1
      %s598 = smul.addr %s597, 16
      %s599 = smul.addr %s598, 8
      %s600 = scalar_lea.vmem %s3, %s599
      // Predicated region
      $region33: #{channel_attention_forward.1} parent=31 // pred_check
        %p601 = pneg %p100
      $region34: #{channel_attention_forward.1} parent=31 // pred_check_branch
        %603 = sbr.rel (%p601) target = $region36
      $region35: #{channel_attention_forward.1} parent=31 // pred_region
        _
      $region36: #{channel_attention_forward.1} parent=31 // pred_fallthru
        _
    $region32: #{channel_attention_forward.1} parent=5 // pred_fallthru
      _
    %p604 = scmp.le.s32.totalorder 2, %s9
    // Predicated region
    $region37: #{channel_attention_forward.1} parent=5 // pred_check
      %p605 = pneg %p604
    $region38: #{channel_attention_forward.1} parent=5 // pred_check_branch
      %607 = sbr.rel (%p605) target = $region40
    $region39: #{channel_attention_forward.1} parent=5 // pred_region
      %s608 = ssub.s32 %s9, 2
      // Predicated region
      $region41: #{channel_attention_forward.1} parent=39 // pred_check
        %p609 = pneg %p106
      $region42: #{channel_attention_forward.1} parent=39 // pred_check_branch
        %611 = sbr.rel (%p609) target = $region44
      $region43: #{channel_attention_forward.1} parent=39 // pred_region
        %p612 = scmp.lt.s32.totalorder %s15, 1
        %s613 = scalar_select %p612, %s15, 1
        %s614 = smul.addr %s613, 16
        %s615 = smul.addr %s614, 8
        %s616 = scalar_lea.vmem %s3, %s615
      $region44: #{channel_attention_forward.1} parent=39 // pred_fallthru
        _
    $region40: #{channel_attention_forward.1} parent=5 // pred_fallthru
      _
  $region6: #{channel_attention_forward.1} parent=0 // loop_footer
    %s13 = sadd.s32 1, %s9
  $region7: #{channel_attention_forward.1} parent=0 // loop_footer_branch
    %8 = sbr.rel target = $region3
  $region8: #{channel_attention_forward.1} parent=0 // loop_exit
    _

</llo_original>
